<compile_context>
chip_gen: v6e
topology: v6e:2x2x1
jax: 0.10.0
libtpu: 0.0.40
codegen_flags: <defaults>
</compile_context>

<pallas_src>
import functools

import jax
import jax.numpy as jnp
from jax import lax
from jax.experimental import pallas as pl
from jax.experimental.pallas import tpu as pltpu

LN_EPS = 1e-5  # torch.nn.LayerNorm default


def _round_up(v, m):
    return (v + m - 1) // m * m


def _device_kind():
    try:
        return jax.devices()[0].device_kind.lower()
    except Exception:
        return ""


def prenorm_kernel(x_ref, w_ref, bias_ref, o_ref, xn_ref, *, d_actual, d_padded):
    # x_ref:   (TM, D_pad) input row tile (same block across j -> no re-DMA)
    # w_ref:   (D_pad, TN) gamma-folded weight tile (padded rows are zero)
    # bias_ref:(1, TN) f32 folded bias
    # o_ref:   (TM, TN) output tile
    # xn_ref:  (TM, D_pad) VMEM scratch caching normalized rows (mm dtype)

    # LayerNorm runs once per row tile: the normalized rows are cached in the
    # VMEM scratch and reused for every output-column tile j > 0.
    @pl.when(pl.program_id(1) == 0)
    def _():
        x = x_ref[...].astype(jnp.float32)
        inv_d = jnp.float32(1.0 / d_actual)
        # Padded x lanes are EXACTLY zero (jnp.pad in the wrapper), so the mean
        # sum is already correct and every padded centered lane equals -mean.
        # Correct the variance analytically instead of masking with iota/where.
        mean = jnp.sum(x, axis=-1, keepdims=True) * inv_d
        centered = x - mean
        ssq = jnp.sum(centered * centered, axis=-1, keepdims=True)
        if d_padded != d_actual:
            ssq = ssq - jnp.float32(d_padded - d_actual) * (mean * mean)
        var = ssq * inv_d
        # Padded x_norm lanes are nonzero (-mean * rsqrt) but hit zeroed W
        # rows, so the matmul stays exact.  Cast to the matmul dtype early.
        xn_ref[...] = (centered * lax.rsqrt(var + LN_EPS)).astype(xn_ref.dtype)

    out = jnp.dot(xn_ref[...], w_ref[...], preferred_element_type=jnp.float32)
    o_ref[...] = (out + bias_ref[...]).astype(o_ref.dtype)


@functools.partial(jax.jit, static_argnames=("tm", "tn"))
def prenorm_linear(x, gamma, beta, w, bias, *, tm=None, tn=None):
    B, N, D = x.shape
    DO = w.shape[1]
    rows = B * N

    # --- Fold the LayerNorm affine into the linear layer (exact, trace time):
    #     (x_norm * gamma + beta) @ W + b
    #  == x_norm @ (gamma[:, None] * W) + (beta @ W + b)
    # TODO(synk): when gamma/beta/W are static across calls, hoist this fold
    # and the weight padding out of the per-call path (extra HBM passes on W).
    gamma_f = gamma.astype(jnp.float32)
    beta_f = beta.astype(jnp.float32)
    w_f = w.astype(jnp.float32)
    w_fold = gamma_f[:, None] * w_f                       # (D, DO)
    bias_fold = beta_f @ w_f + bias.astype(jnp.float32)   # (DO,)

    # bf16 inputs keep the native bf16 x bf16 -> f32 MXU fast path.
    mm_dtype = jnp.bfloat16 if x.dtype == jnp.bfloat16 else jnp.float32

    itemsize = jnp.dtype(x.dtype).itemsize
    mm_itemsize = jnp.dtype(mm_dtype).itemsize
    sublane = {4: 8, 2: 16, 1: 32}.get(itemsize, 8)

    kind = _device_kind()
    is_v7 = "v7" in kind
    # v7x: 64 MiB physical VMEM per TC; v5e/v6e: 128 MiB.
    if not kind:
        vmem_budget = 48 * 1024 * 1024
    elif is_v7:
        vmem_budget = 44 * 1024 * 1024
    else:
        vmem_budget = 96 * 1024 * 1024

    if tn is None:
        tn = 512
    if tm is None:
        if is_v7:
            tm = 256
        else:
            tm = 512 if mm_dtype == jnp.bfloat16 else 256

    d_pad = _round_up(D, 128)
    rows_aligned = _round_up(rows, sublane)
    tm_eff = min(_round_up(tm, sublane), rows_aligned)
    tn_eff = min(_round_up(tn, 128), _round_up(DO, 128))

    def vmem_need(tm_c, tn_c):
        return (2 * tm_c * d_pad * itemsize          # x tile, double-buffered
                + 2 * d_pad * tn_c * mm_itemsize     # W tile, double-buffered
                + 2 * tm_c * tn_c * itemsize         # out tile, double-buffered
                + tm_c * d_pad * mm_itemsize         # x_norm scratch
                + 2 * tm_c * d_pad * 4)              # f32 LN temporaries

    # Shrink tiles (mostly relevant on v7x) until the working set fits VMEM.
    # TODO(synk): for very large D (>~8K) on v7x, add a K grid axis with an
    # f32 VMEM accumulator instead of shrinking TN/TM.
    while vmem_need(tm_eff, tn_eff) > vmem_budget:
        if tn_eff > 256:
            tn_eff = max(256, _round_up(tn_eff // 2, 128))
        elif tm_eff > max(64, sublane):
            tm_eff = max(sublane, _round_up(tm_eff // 2, sublane))
        elif tn_eff > 128:
            tn_eff = 128
        else:
            break

    if rows_aligned > tm_eff:
        # Reduce dead work in the last row tile: among tiles in [tm/2, tm]
        # pick the one minimizing round-up waste (then prefer the largest).
        best = ((-rows_aligned) % tm_eff, -tm_eff)
        best_tm = tm_eff
        cand = tm_eff - sublane
        while cand >= max(tm_eff // 2, sublane):
            key = ((-rows_aligned) % cand, -cand)
            if key < best:
                best, best_tm = key, cand
            cand -= sublane
        tm_eff = best_tm
    elif is_v7 and rows_aligned > sublane:
        # Single row tile: split it so both v7x TensorCores get work on the
        # "parallel" rows axis.
        tm_eff = _round_up(-(-rows_aligned // 2), sublane)

    rows_pad = _round_up(rows_aligned, tm_eff)
    do_pad = _round_up(DO, tn_eff)

    # --- Pad / cast only when actually required (aligned transformer shapes
    # skip these extra HBM passes entirely).
    x2 = x.reshape(rows, D)
    if rows_pad != rows or d_pad != D:
        # NOTE: padded x lanes MUST be exactly zero -- the in-kernel analytic
        # variance correction relies on it.
        x2 = jnp.pad(x2, ((0, rows_pad - rows), (0, d_pad - D)))
    w_mm = w_fold.astype(mm_dtype)
    if d_pad != D or do_pad != DO:
        # NOTE: padded W rows/cols MUST be exactly zero for matmul exactness.
        w_mm = jnp.pad(w_mm, ((0, d_pad - D), (0, do_pad - DO)))
    bias_p = bias_fold
    if do_pad != DO:
        bias_p = jnp.pad(bias_p, (0, do_pad - DO))
    bias_p = bias_p.reshape(1, do_pad)

    grid = (rows_pad // tm_eff, do_pad // tn_eff)
    kernel = functools.partial(prenorm_kernel, d_actual=D, d_padded=d_pad)

    out2 = pl.pallas_call(
        kernel,
        out_shape=jax.ShapeDtypeStruct((rows_pad, do_pad), x.dtype),
        grid_spec=pltpu.PrefetchScalarGridSpec(
            num_scalar_prefetch=0,
            grid=grid,
            in_specs=[
                pl.BlockSpec((tm_eff, d_pad), lambda i, j: (i, 0)),   # x rows
                pl.BlockSpec((d_pad, tn_eff), lambda i, j: (0, j)),   # folded W
                pl.BlockSpec((1, tn_eff), lambda i, j: (0, j)),       # folded b
            ],
            out_specs=pl.BlockSpec((tm_eff, tn_eff), lambda i, j: (i, j)),
            scratch_shapes=[pltpu.VMEM((tm_eff, d_pad), mm_dtype)],
        ),
        compiler_params=pltpu.CompilerParams(
            # j ("arbitrary") reuses the cached x_norm scratch; rows axis is
            # "parallel" so v7x's two TensorCores shard independent row tiles.
            dimension_semantics=("parallel", "arbitrary"),
            vmem_limit_bytes=vmem_budget,
        ),
    )(x2, w_mm, bias_p)

    return out2[:rows, :DO].reshape(B, N, DO)


def prenorm_linear_ref(x, gamma, beta, w, bias):
    xf = x.astype(jnp.float32)
    mean = jnp.mean(xf, axis=-1, keepdims=True)
    var = jnp.mean((xf - mean) ** 2, axis=-1, keepdims=True)
    xn = (xf - mean) * lax.rsqrt(var + LN_EPS)
    y = xn * gamma.astype(jnp.float32) + beta.astype(jnp.float32)
    return (y @ w.astype(jnp.float32) + bias.astype(jnp.float32)).astype(x.dtype)


if __name__ == "__main__":
    key = jax.random.PRNGKey(0)
    B, N, D = 2, 8, 32  # batch, seq, hidden

    kx, kg, kbt, kw, kb = jax.random.split(key, 5)
    x = jax.random.normal(kx, (B, N, D), dtype=jnp.float32)

    # nn.LayerNorm(dim) params (perturbed from default init to exercise the
    # gamma/beta -> weight/bias fold).
    gamma = 1.0 + 0.1 * jax.random.normal(kg, (D,), dtype=jnp.float32)
    beta = 0.01 * jax.random.normal(kbt, (D,), dtype=jnp.float32)

    # fn = Linear(dim, dim), deterministic synthetic init.
    w = jax.random.normal(kw, (D, D), dtype=jnp.float32) * 0.05
    bias = jax.random.normal(kb, (D,), dtype=jnp.float32) * 0.01

    out = prenorm_linear(x, gamma, beta, w, bias)
    jax.block_until_ready(out)

    ref = prenorm_linear_ref(x, gamma, beta, w, bias)
    assert out.shape == (B, N, D)
    assert jnp.allclose(out, ref, atol=1e-4, rtol=1e-4)

    print("KERNEL_OK")
</pallas_src>

<mosaic_0001>
module attributes {stable_mosaic.version = 11 : i64} {
  func.func @prenorm_kernel(%arg0: i32, %arg1: i32, %arg2: memref<16x128xf32, #tpu.memory_space<vmem>>, %arg3: memref<128x128xf32, #tpu.memory_space<vmem>>, %arg4: memref<1x128xf32, #tpu.memory_space<vmem>>, %arg5: memref<16x128xf32, #tpu.memory_space<vmem>>, %arg6: memref<16x128xf32, #tpu.memory_space<vmem>>) attributes {dimension_semantics = [#tpu.dimension_semantics<parallel>, #tpu.dimension_semantics<arbitrary>], iteration_bounds = array<i64: 1, 1>, scalar_prefetch = 0 : i64, scratch_operands = 1 : i64, tpu.core_type = #tpu.core_type<tc>, window_params = [{transform_indices = @transform_0, window_bounds = array<i64: 16, 128>}, {transform_indices = @transform_1, window_bounds = array<i64: 128, 128>}, {transform_indices = @transform_2, window_bounds = array<i64: 1, 128>}, {transform_indices = @transform_3, window_bounds = array<i64: 16, 128>}]} {
    %c0_i32 = arith.constant 0 : i32
    %0 = arith.cmpi eq, %arg1, %c0_i32 : i32
    %1 = arith.extui %0 : i1 to i32
    %c0_i32_0 = arith.constant 0 : i32
    %2 = arith.cmpi ne, %1, %c0_i32_0 : i32
    scf.if %2 {
      %c0_8 = arith.constant 0 : index
      %c0_9 = arith.constant 0 : index
      %10 = vector.load %arg2[%c0_8, %c0_9] : memref<16x128xf32, #tpu.memory_space<vmem>>, vector<16x128xf32>
      %cst_10 = arith.constant dense<0.000000e+00> : vector<16xf32>
      %11 = vector.multi_reduction <add>, %10, %cst_10 [1] : vector<16x128xf32> to vector<16xf32>
      %12 = vector.shape_cast %11 : vector<16xf32> to vector<16x1xf32>
      %cst_11 = arith.constant 3.125000e-02 : f32
      %13 = vector.broadcast %cst_11 : f32 to vector<16x1xf32>
      %14 = arith.mulf %12, %13 : vector<16x1xf32>
      %15 = vector.broadcast %14 : vector<16x1xf32> to vector<16x128xf32>
      %16 = arith.subf %10, %15 : vector<16x128xf32>
      %17 = arith.mulf %16, %16 : vector<16x128xf32>
      %cst_12 = arith.constant dense<0.000000e+00> : vector<16xf32>
      %18 = vector.multi_reduction <add>, %17, %cst_12 [1] : vector<16x128xf32> to vector<16xf32>
      %19 = vector.shape_cast %18 : vector<16xf32> to vector<16x1xf32>
      %20 = arith.mulf %14, %14 : vector<16x1xf32>
      %cst_13 = arith.constant 9.600000e+01 : f32
      %21 = vector.broadcast %cst_13 : f32 to vector<16x1xf32>
      %22 = arith.mulf %21, %20 : vector<16x1xf32>
      %23 = arith.subf %19, %22 : vector<16x1xf32>
      %cst_14 = arith.constant 3.125000e-02 : f32
      %24 = vector.broadcast %cst_14 : f32 to vector<16x1xf32>
      %25 = arith.mulf %23, %24 : vector<16x1xf32>
      %cst_15 = arith.constant 9.99999974E-6 : f32
      %26 = vector.broadcast %cst_15 : f32 to vector<16x1xf32>
      %27 = arith.addf %25, %26 : vector<16x1xf32>
      %28 = math.rsqrt %27 : vector<16x1xf32>
      %29 = vector.broadcast %28 : vector<16x1xf32> to vector<16x128xf32>
      %30 = arith.mulf %16, %29 : vector<16x128xf32>
      %c0_16 = arith.constant 0 : index
      %c0_17 = arith.constant 0 : index
      %31 = vector.load %arg6[%c0_16, %c0_17] : memref<16x128xf32, #tpu.memory_space<vmem>>, vector<16x128xf32>
      tpu.vector_store %arg6[%c0_16, %c0_17], %30 {strides = array<i32>} : memref<16x128xf32, #tpu.memory_space<vmem>>, vector<16x128xf32>,
    } else {
    }
    %c0 = arith.constant 0 : index
    %c0_1 = arith.constant 0 : index
    %3 = vector.load %arg6[%c0, %c0_1] : memref<16x128xf32, #tpu.memory_space<vmem>>, vector<16x128xf32>
    %c0_2 = arith.constant 0 : index
    %c0_3 = arith.constant 0 : index
    %4 = vector.load %arg3[%c0_2, %c0_3] : memref<128x128xf32, #tpu.memory_space<vmem>>, vector<128x128xf32>
    %cst = arith.constant dense<0.000000e+00> : vector<16x128xf32>
    %5 = tpu.matmul %3, %4, %cst {dimension_numbers = #tpu.dot_dimension_numbers<[1], [0], [0], [1], [0, 0, 1, 1], [], []>} : vector<16x128xf32>, vector<128x128xf32>, vector<16x128xf32> -> vector<16x128xf32>
    %c0_4 = arith.constant 0 : index
    %c0_5 = arith.constant 0 : index
    %6 = vector.load %arg4[%c0_4, %c0_5] : memref<1x128xf32, #tpu.memory_space<vmem>>, vector<1x128xf32>
    %7 = vector.broadcast %6 : vector<1x128xf32> to vector<16x128xf32>
    %8 = arith.addf %5, %7 : vector<16x128xf32>
    %c0_6 = arith.constant 0 : index
    %c0_7 = arith.constant 0 : index
    %9 = vector.load %arg5[%c0_6, %c0_7] : memref<16x128xf32, #tpu.memory_space<vmem>>, vector<16x128xf32>
    tpu.vector_store %arg5[%c0_6, %c0_7], %8 {strides = array<i32>} : memref<16x128xf32, #tpu.memory_space<vmem>>, vector<16x128xf32>,
    return
  }
  func.func @transform_0(%arg0: i32, %arg1: i32) -> (i32, i32) {
    %c0_i32 = arith.constant 0 : i32
    %c0_i32_0 = arith.constant 0 : i32
    return %arg0, %c0_i32 : i32, i32
  }
  func.func @transform_1(%arg0: i32, %arg1: i32) -> (i32, i32) {
    %c0_i32 = arith.constant 0 : i32
    %c0_i32_0 = arith.constant 0 : i32
    return %c0_i32, %arg1 : i32, i32
  }
  func.func @transform_2(%arg0: i32, %arg1: i32) -> (i32, i32) {
    %c0_i32 = arith.constant 0 : i32
    %c0_i32_0 = arith.constant 0 : i32
    return %c0_i32, %arg1 : i32, i32
  }
  func.func @transform_3(%arg0: i32, %arg1: i32) -> (i32, i32) {
    %c0_i32 = arith.constant 0 : i32
    return %arg0, %arg1 : i32, i32
  }
}

</mosaic_0001>

<llo_original>
// kernel: prenorm_linear.1
$region0: #{prenorm_linear.1}
  #allocation0 [shape = 'u32[]', space=smem, size = 0x4, offset = 0x4, fixed_abs, tag = 'smem constant byte address 0x4 - core index']
  #allocation1 [shape = 'u32[144,128]{1,0:T(1,128)}', space=vmem, size = 0x12000, scoped, tag = 'internal scratch']
  #allocation2 [shape = 'f32[16,128]{1,0:T(8,128)}', space=vmem, size = 0x2000, scoped, tag = 'scratch operand']
  %s0 = inlined_call_operand.vmem [shape: f32[16,128], index: 0, kind: input, shape index: {}]
  %s1 = inlined_call_operand.vmem [shape: f32[128,128], index: 1, kind: input, shape index: {}]
  %s2 = inlined_call_operand.vmem [shape: f32[1,128], index: 2, kind: input, shape index: {}]
  %s3 = inlined_call_operand.vmem [shape: f32[16,128], index: 3, kind: output, shape index: {}]
  %s4 = sld [smem:[#allocation0]]
  $region26: #{prenorm_linear.1} parent=0
    _
  %s6 = ssub.s32 1, %s4
  %s7 = scalar_select 0, %s6, %s4
  // Predicated region
  $region2: #{prenorm_linear.1} parent=0 // pred_check
    _
  $region3: #{prenorm_linear.1} parent=0 // pred_check_branch
    %9 = sbr.rel (0) target = $region5
  $region4: #{prenorm_linear.1} parent=0 // pred_region
    _
  $region5: #{prenorm_linear.1} parent=0 // pred_fallthru
    _
  // Predicated region
  $region6: #{prenorm_linear.1} parent=0 // pred_check
    _
  $region7: #{prenorm_linear.1} parent=0 // pred_check_branch
    %11 = sbr.rel (0) target = $region9
  $region8: #{prenorm_linear.1} parent=0 // pred_region
    _
  $region9: #{prenorm_linear.1} parent=0 // pred_fallthru
    _
  // Predicated region
  $region10: #{prenorm_linear.1} parent=0 // pred_check
    _
  $region11: #{prenorm_linear.1} parent=0 // pred_check_branch
    %13 = sbr.rel (0) target = $region13
  $region12: #{prenorm_linear.1} parent=0 // pred_region
    _
  $region13: #{prenorm_linear.1} parent=0 // pred_fallthru
    _
  %p14 = scmp.eq.s32.totalorder 0, 0
  // Predicated region
  $region14: #{prenorm_linear.1} parent=0 // pred_check
    %p15 = pneg %p14
  $region15: #{prenorm_linear.1} parent=0 // pred_check_branch
    %17 = sbr.rel (%p15) target = $region17
  $region16: #{prenorm_linear.1} parent=0 // pred_region
    %v18 = vld [vmem:[%s0] sm:$0xff]
    %v19 = vld [vmem:[%s0 + $0x8] sm:$0xff]
    %20 = vadd.xlane.f32.xlu0 %v18
    %v21 = vpop.xlane.xlu0 %20
    %22 = vadd.xlane.f32.xlu0 %v19
    %v23 = vpop.xlane.xlu0 %22
    %v24 = vmul.f32 %v21, 0.03125
    %v25 = vmul.f32 %v23, 0.03125
    %v26 = vsub.f32 %v18, %v24
    %v27 = vsub.f32 %v19, %v25
    %v28 = vmul.f32 %v26, %v26
    %v29 = vmul.f32 %v27, %v27
    %30 = vadd.xlane.f32.xlu0 %v28
    %v31 = vpop.xlane.xlu0 %30
    %32 = vadd.xlane.f32.xlu0 %v29
    %v33 = vpop.xlane.xlu0 %32
    %v34 = vmul.f32 %v24, %v24
    %v35 = vmul.f32 %v25, %v25
    %v36 = vmul.f32 %v34, 96.0
    %v37 = vmul.f32 %v35, 96.0
    %v38 = vsub.f32 %v31, %v36
    %v39 = vsub.f32 %v33, %v37
    %v40 = vmul.f32 %v38, 0.03125
    %v41 = vmul.f32 %v39, 0.03125
    %v42 = vadd.f32 %v40, 1e-05
    %v43 = vadd.f32 %v41, 1e-05
    %v44 = vrsqrt.pop %v42
    %v45 = vrsqrt.pop %v43
    %v46 = vmul.f32 %v26, %v44
    %v47 = vmul.f32 %v27, %v45
    %48 = vst [vmem:[#allocation2] sm:$0xff] %v46
    %49 = vst [vmem:[#allocation2 + $0x8] sm:$0xff] %v47
  $region17: #{prenorm_linear.1} parent=0 // pred_fallthru
    _
  %v50 = vld [vmem:[#allocation2] sm:$0xff]
  %v51 = vld [vmem:[#allocation2 + $0x8] sm:$0xff]
  %v52 = vld [vmem:[%s1] sm:$0xff]
  %v53 = vld [vmem:[%s1 + $0x8] sm:$0xff]
  %v54 = vld [vmem:[%s1 + $0x10] sm:$0xff]
  %v55 = vld [vmem:[%s1 + $0x18] sm:$0xff]
  %v56 = vld [vmem:[%s1 + $0x20] sm:$0xff]
  %v57 = vld [vmem:[%s1 + $0x28] sm:$0xff]
  %v58 = vld [vmem:[%s1 + $0x30] sm:$0xff]
  %v59 = vld [vmem:[%s1 + $0x38] sm:$0xff]
  %v60 = vld [vmem:[%s1 + $0x40] sm:$0xff]
  %v61 = vld [vmem:[%s1 + $0x48] sm:$0xff]
  %v62 = vld [vmem:[%s1 + $0x50] sm:$0xff]
  %v63 = vld [vmem:[%s1 + $0x58] sm:$0xff]
  %v64 = vld [vmem:[%s1 + $0x60] sm:$0xff]
  %v65 = vld [vmem:[%s1 + $0x68] sm:$0xff]
  %v66 = vld [vmem:[%s1 + $0x70] sm:$0xff]
  %v67 = vld [vmem:[%s1 + $0x78] sm:$0xff]
  %v68 = vld [vmem:[%s2] sm:$0x1]
  %v70 = vlaneseq
  %v71 = vshrl.u32 %v70, 7
  %v72 = vsub.s32 0, %v71
  %v73 = vrot.slane %v68, %v72
  %75 = vmatprep.subr.mxu0 0.0
  %76 = vmatpush1.msra.mxu0 %v67
  %77 = vmatprep.subr.mxu0 0.0
  %78 = vmatpush1.msra.mxu0 %v66
  %79 = vmatprep.subr.mxu0 0.0
  %80 = vmatpush1.msra.mxu0 %v65
  %81 = vmatprep.subr.mxu0 0.0
  %82 = vmatpush1.msra.mxu0 %v64
  %83 = vmatprep.subr.mxu0 0.0
  %84 = vmatpush1.msra.mxu0 %v63
  %85 = vmatprep.subr.mxu0 0.0
  %86 = vmatpush1.msra.mxu0 %v62
  %87 = vmatprep.subr.mxu0 0.0
  %88 = vmatpush1.msra.mxu0 %v61
  %89 = vmatprep.subr.mxu0 0.0
  %90 = vmatpush1.msra.mxu0 %v60
  %91 = vmatprep.subr.mxu0 0.0
  %92 = vmatpush1.msra.mxu0 %v59
  %93 = vmatprep.subr.mxu0 0.0
  %94 = vmatpush1.msra.mxu0 %v58
  %95 = vmatprep.subr.mxu0 0.0
  %96 = vmatpush1.msra.mxu0 %v57
  %97 = vmatprep.subr.mxu0 0.0
  %98 = vmatpush1.msra.mxu0 %v56
  %99 = vmatprep.subr.mxu0 0.0
  %100 = vmatpush1.msra.mxu0 %v55
  %101 = vmatprep.subr.mxu0 0.0
  %102 = vmatpush1.msra.mxu0 %v54
  %103 = vmatprep.subr.mxu0 0.0
  %104 = vmatpush1.msra.mxu0 %v53
  %105 = vmatprep.subr.mxu0 0.0
  %106 = vmatpush1.msra.mxu0 %v52
  %107 = vmatprep.subr.mxu0 0.0
  %108 = vmatpush2.msra.mxu0 0.0
  %109 = vmatprep.subr.mxu0 0.0
  %110 = vmatpush2.msra.mxu0 0.0
  %111 = vmatprep.subr.mxu0 0.0
  %112 = vmatpush2.msra.mxu0 0.0
  %113 = vmatprep.subr.mxu0 0.0
  %114 = vmatpush2.msra.mxu0 0.0
  %115 = vmatprep.subr.mxu0 0.0
  %116 = vmatpush2.msra.mxu0 0.0
  %117 = vmatprep.subr.mxu0 0.0
  %118 = vmatpush2.msra.mxu0 0.0
  %119 = vmatprep.subr.mxu0 0.0
  %120 = vmatpush2.msra.mxu0 0.0
  %121 = vmatprep.subr.mxu0 0.0
  %122 = vmatpush2.msra.mxu0 0.0
  %123 = vmatprep.subr.mxu0 0.0
  %124 = vmatpush2.msra.mxu0 0.0
  %125 = vmatprep.subr.mxu0 0.0
  %126 = vmatpush2.msra.mxu0 0.0
  %127 = vmatprep.subr.mxu0 0.0
  %128 = vmatpush2.msra.mxu0 0.0
  %129 = vmatprep.subr.mxu0 0.0
  %130 = vmatpush2.msra.mxu0 0.0
  %131 = vmatprep.subr.mxu0 0.0
  %132 = vmatpush2.msra.mxu0 0.0
  %133 = vmatprep.subr.mxu0 0.0
  %134 = vmatpush2.msra.mxu0 0.0
  %135 = vmatprep.subr.mxu0 0.0
  %136 = vmatpush2.msra.mxu0 0.0
  %137 = vmatprep.subr.mxu0 0.0
  %138 = vmatpush2.msra.mxu0 0.0
  %139 = vmatprep.mubr.f32.mxu0 0.0
  %140 = vmatmul.mubr.f32.gmra.mxu0 %v50
  %v141 = vpop.f32.mrf.mxu0
  %v142 = vadd.f32 %v73, %v141
  %v143 = vpop.f32.mrf.mxu0
  %144 = vmatprep.mubr.f32.mxu0 0.0
  %145 = vmatmul.mubr.f32.gmra.mxu0 %v51
  %v146 = vpop.f32.mrf.mxu0
  %v147 = vadd.f32 %v73, %v146
  %v148 = vpop.f32.mrf.mxu0
  %149 = vdwg.mxu0
  %150 = vst [vmem:[%s3] sm:$0xff] %v142
  %151 = vst [vmem:[%s3 + $0x8] sm:$0xff] %v147
  // Predicated region
  $region18: #{prenorm_linear.1} parent=0 // pred_check
    _
  $region19: #{prenorm_linear.1} parent=0 // pred_check_branch
    %153 = sbr.rel (0) target = $region21
  $region20: #{prenorm_linear.1} parent=0 // pred_region
    _
  $region21: #{prenorm_linear.1} parent=0 // pred_fallthru
    _
  // Predicated region
  $region22: #{prenorm_linear.1} parent=0 // pred_check
    _
  $region23: #{prenorm_linear.1} parent=0 // pred_check_branch
    %155 = sbr.rel (0) target = $region25
  $region24: #{prenorm_linear.1} parent=0 // pred_region
    _
  $region25: #{prenorm_linear.1} parent=0 // pred_fallthru
    _

</llo_original>
